<compile_context>
chip_gen: v7x
topology: tpu7x:2x2x1
jax: 0.10.0
libtpu: 0.0.40
codegen_flags: <defaults>
</compile_context>

<pallas_src>
import functools

import jax
import jax.numpy as jnp
from jax.experimental import pallas as pl
from jax.experimental.pallas import tpu as pltpu


# --------------------------------------------------------------------------
# Kernels
# --------------------------------------------------------------------------
def _affine_kernel_fused(z_ref, h_ref, out_ref, ld_ref, *, d):
    """D untiled: one (bt, D) z block + one (bt, 2D) h block per step."""
    z = z_ref[...].astype(jnp.float32)
    h = h_ref[...].astype(jnp.float32)
    t = h[:, :d]
    s = h[:, d:]
    out_ref[...] = (z * jnp.exp(s) + t).astype(out_ref.dtype)
    ld_ref[...] = jnp.sum(s, axis=-1, keepdims=True)


def _affine_kernel_split(z_ref, t_ref, s_ref, out_ref, ld_ref):
    """D tiled: resident log-det accumulator across the j (reduction) axis."""
    j = pl.program_id(1)

    z = z_ref[...].astype(jnp.float32)
    t = t_ref[...].astype(jnp.float32)
    s = s_ref[...].astype(jnp.float32)

    out_ref[...] = (z * jnp.exp(s) + t).astype(out_ref.dtype)

    @pl.when(j == 0)
    def _():
        ld_ref[...] = jnp.zeros_like(ld_ref)

    ld_ref[...] = ld_ref[...] + jnp.sum(s, axis=-1, keepdims=True)


# --------------------------------------------------------------------------
# Tile selection
# --------------------------------------------------------------------------
def _sublane_pack(dtype):
    isz = jnp.dtype(dtype).itemsize
    return max(8, 32 // max(isz, 1))


def _chip_info():
    """(physical VMEM bytes, two-TensorCore chip?) with safe fallbacks."""
    vmem_bytes = 128 << 20
    try:
        info = pltpu.get_tpu_info()
        vmem_bytes = int(getattr(info, "vmem_capacity_bytes", vmem_bytes))
    except Exception:
        pass
    # v7x signature: 64 MiB VMEM per TC, 2 TCs per chip.
    two_tc = vmem_bytes <= (64 << 20)
    return vmem_bytes, two_tc


def _choose_tiles(batch, dim, z_dtype, h_dtype):
    """Pick (bt, dt, vmem_budget, vmem_limit_cap) for a double-buffered pipeline."""
    z_isz = jnp.dtype(z_dtype).itemsize
    h_isz = jnp.dtype(h_dtype).itemsize
    pack = _sublane_pack(z_dtype)
    _, two_tc = _chip_info()

    if two_tc:                      # v7x: 64 MiB VMEM, keep headroom
        budget = 40 << 20
        vmem_cap = 48 << 20
    else:                           # v5e / v6e: 128 MiB VMEM, single TC
        budget = 64 << 20
        vmem_cap = 96 << 20

    # Per-row bytes moved (z + out in z dtype, t + s halves of h).
    def per_row_hbm(dt):
        return dt * (2 * z_isz + 2 * h_isz)

    # Double-buffered VMEM working set for a (bt, dt) step.
    def work_set(bt, dt):
        return 2 * (bt * dt * (2 * z_isz + 2 * h_isz) + bt * 4)

    # Prefer keeping the full D on the lane axis; only split when even a
    # single-pack-row tile would blow the VMEM budget (rare: D ~ 200k f32).
    d_tile = dim
    if work_set(pack, d_tile) > budget and dim % 128 == 0:
        dt = dim
        while dt > 128 and (work_set(pack, dt) > budget or dim % dt != 0):
            dt //= 2
        if dim % dt == 0 and dt % 128 == 0:
            d_tile = dt

    if batch <= pack:
        return batch, d_tile, budget, vmem_cap

    # Per-step HBM byte target (~4 MiB per stream) to amortize the ~0.35 us
    # fixed per-grid-step overhead, clamped by the VMEM budget.
    step_target = 16 << 20
    cap = max(pack, min(step_target // max(per_row_hbm(d_tile), 1),
                        budget // max(work_set(1, d_tile), 1)))

    if two_tc and batch >= 2 * pack:
        # Ensure >= 2 'parallel' grid steps so both TensorCores get work.
        cap = min(cap, max(pack, (batch // (2 * pack)) * pack))

    bt = min(cap, batch)
    bt = max(pack, (bt // pack) * pack)

    # Ragged batches: prefer a pack-aligned divisor of B, or one full-batch
    # block, over an HBM-round-trip jnp.pad in the wrapper.
    if batch % bt != 0:
        best = 0
        cand = pack
        while cand <= bt:
            if batch % cand == 0:
                best = cand
            cand += pack
        if best >= max(pack, bt // 4):
            bt = best
        elif work_set(batch, d_tile) <= budget:
            bt = batch

    return bt, d_tile, budget, vmem_cap


# --------------------------------------------------------------------------
# Wrapper
# --------------------------------------------------------------------------
def affine_transformer_forward(z, h, *, trans_features=2,
                               batch_tile=None, d_tile=None):
    """Affine transformer forward + log_det.

    Args:
      z: (B, D) input variable.
      h: (B, D * trans_features) conditioner output, [shift | log_scale].
    Returns:
      out:     (B, D)  transformed variable (same dtype as z)
      log_det: (B,)    log|det Jacobian| per sample (float32)
    """
    assert trans_features == 2, "affine transformer uses 2 params per dim"
    B, D = z.shape
    assert h.shape == (B, D * trans_features)

    bt, dt, _budget, vmem_cap = _choose_tiles(B, D, z.dtype, h.dtype)

    # Validate / round user overrides against the (8,128) + packing rules.
    pack = _sublane_pack(z.dtype)
    if batch_tile is not None:
        bt = B if batch_tile >= B else max(pack, (batch_tile // pack) * pack)
    if d_tile is not None and D % d_tile == 0 and (d_tile == D or d_tile % 128 == 0):
        dt = d_tile
    if D % dt != 0 or (dt != D and dt % 128 != 0):
        dt = D
    nd = D // dt

    # Last-resort padding (only when no divisor / full-batch block was usable,
    # e.g. a user-supplied batch_tile that does not divide B).
    Bp = B
    z_in, h_in = z, h
    if bt < B and B % bt != 0:
        Bp = pl.cdiv(B, bt) * bt
        z_in = jnp.pad(z, ((0, Bp - B), (0, 0)))
        h_in = jnp.pad(h, ((0, Bp - B), (0, 0)))

    ld_spec_block = (bt, 1)

    if nd == 1:
        # Common case: one DMA stream for h, split in-kernel.
        kernel = functools.partial(_affine_kernel_fused, d=D)
        grid = (Bp // bt,)
        in_specs = [
            pl.BlockSpec((bt, D), lambda i: (i, 0)),
            pl.BlockSpec((bt, 2 * D), lambda i: (i, 0)),
        ]
        out_specs = (
            pl.BlockSpec((bt, D), lambda i: (i, 0)),
            pl.BlockSpec(ld_spec_block, lambda i: (i, 0)),
        )
        dim_sem = ("parallel",)
        operands = (z_in, h_in)
    else:
        # Huge-D fallback: tile D, address the [t | s] halves of h via block
        # indices (h passed twice, no wrapper-side slice), resident ld block.
        kernel = _affine_kernel_split
        grid = (Bp // bt, nd)
        in_specs = [
            pl.BlockSpec((bt, dt), lambda i, j: (i, j)),
            pl.BlockSpec((bt, dt), lambda i, j: (i, j)),
            pl.BlockSpec((bt, dt), lambda i, j, _nd=nd: (i, _nd + j)),
        ]
        out_specs = (
            pl.BlockSpec((bt, dt), lambda i, j: (i, j)),
            pl.BlockSpec(ld_spec_block, lambda i, j: (i, 0)),
        )
        dim_sem = ("parallel", "arbitrary")
        operands = (z_in, h_in, h_in)

    z_isz = jnp.dtype(z.dtype).itemsize
    h_isz = jnp.dtype(h.dtype).itemsize
    work_set = 2 * (bt * dt * (2 * z_isz + 2 * h_isz) + bt * 4)
    vmem_limit = int(min(max(work_set + (8 << 20), 24 << 20), vmem_cap))

    out, ld = pl.pallas_call(
        kernel,
        out_shape=(
            jax.ShapeDtypeStruct((Bp, D), z.dtype),
            jax.ShapeDtypeStruct((Bp, 1), jnp.float32),
        ),
        grid_spec=pl.GridSpec(
            grid=grid,
            in_specs=in_specs,
            out_specs=out_specs,
        ),
        compiler_params=pltpu.CompilerParams(
            dimension_semantics=dim_sem,
            vmem_limit_bytes=vmem_limit,
        ),
    )(*operands)

    return out[:B], ld[:B, 0]


# --------------------------------------------------------------------------
# Reference + tests
# --------------------------------------------------------------------------
def _reference(z, h):
    D = z.shape[1]
    t = h[:, :D].astype(jnp.float32)
    s = h[:, D:].astype(jnp.float32)
    out = z.astype(jnp.float32) * jnp.exp(s) + t
    ld = jnp.sum(s, axis=-1)
    return out, ld


if __name__ == "__main__":
    key = jax.random.PRNGKey(0)
    trans_features = 2
    keys = jax.random.split(key, 6)

    # --- f32, lane-aligned D, fused single-h-stream path -------------------
    B, D = 16, 128
    z = jax.random.normal(keys[0], (B, D), dtype=jnp.float32)
    h = 0.1 * jax.random.normal(keys[1], (B, D * trans_features),
                                dtype=jnp.float32)

    out, log_det = affine_transformer_forward(z, h, trans_features=trans_features)
    out = jax.block_until_ready(out)
    log_det = jax.block_until_ready(log_det)

    out_ref, ld_ref = _reference(z, h)
    assert out.shape == (B, D) and log_det.shape == (B,)
    assert jnp.allclose(out, out_ref, atol=1e-5, rtol=1e-5)
    assert jnp.allclose(log_det, ld_ref, atol=1e-5, rtol=1e-5)

    # --- bf16 storage, ragged batch (full-batch block, no pad copy) --------
    B2, D2 = 12, 128
    z2 = jax.random.normal(keys[2], (B2, D2), dtype=jnp.float32).astype(jnp.bfloat16)
    h2 = (0.1 * jax.random.normal(keys[3], (B2, D2 * trans_features),
                                  dtype=jnp.float32)).astype(jnp.bfloat16)

    out2, log_det2 = affine_transformer_forward(z2, h2,
                                                trans_features=trans_features)
    out2 = jax.block_until_ready(out2)
    log_det2 = jax.block_until_ready(log_det2)

    out2_ref_f32, ld2_ref = _reference(z2, h2)
    out2_ref = out2_ref_f32.astype(jnp.bfloat16)
    assert out2.shape == (B2, D2) and log_det2.shape == (B2,)
    assert jnp.allclose(out2.astype(jnp.float32),
                        out2_ref.astype(jnp.float32), atol=1e-2, rtol=1e-2)
    assert jnp.allclose(log_det2, ld2_ref, atol=1e-2, rtol=1e-2)

    # --- forced D split: exercises the resident log-det accumulator path ---
    B3, D3 = 32, 256
    z3 = jax.random.normal(keys[4], (B3, D3), dtype=jnp.float32)
    h3 = 0.1 * jax.random.normal(keys[5], (B3, D3 * trans_features),
                                 dtype=jnp.float32)

    out3, log_det3 = affine_transformer_forward(z3, h3,
                                                trans_features=trans_features,
                                                batch_tile=16, d_tile=128)
    out3 = jax.block_until_ready(out3)
    log_det3 = jax.block_until_ready(log_det3)

    out3_ref, ld3_ref = _reference(z3, h3)
    assert out3.shape == (B3, D3) and log_det3.shape == (B3,)
    assert jnp.allclose(out3, out3_ref, atol=1e-5, rtol=1e-5)
    assert jnp.allclose(log_det3, ld3_ref, atol=1e-5, rtol=1e-5)

    print("KERNEL_OK")
</pallas_src>

<mosaic_0001>
module attributes {stable_mosaic.version = 11 : i64} {
  func.func @_affine_kernel_fused(%arg0: i32, %arg1: memref<16x128xf32, #tpu.memory_space<vmem>>, %arg2: memref<16x256xf32, #tpu.memory_space<vmem>>, %arg3: memref<16x128xf32, #tpu.memory_space<vmem>>, %arg4: memref<16x1xf32, #tpu.memory_space<vmem>>) attributes {dimension_semantics = [#tpu.dimension_semantics<parallel>], iteration_bounds = array<i64: 1>, scalar_prefetch = 0 : i64, scratch_operands = 0 : i64, tpu.core_type = #tpu.core_type<tc>, window_params = [{transform_indices = @transform_0, window_bounds = array<i64: 16, 128>}, {transform_indices = @transform_1, window_bounds = array<i64: 16, 256>}, {transform_indices = @transform_2, window_bounds = array<i64: 16, 128>}, {transform_indices = @transform_3, window_bounds = array<i64: 16, 1>}]} {
    %c0 = arith.constant 0 : index
    %c0_0 = arith.constant 0 : index
    %0 = vector.load %arg1[%c0, %c0_0] : memref<16x128xf32, #tpu.memory_space<vmem>>, vector<16x128xf32>
    %c0_1 = arith.constant 0 : index
    %c0_2 = arith.constant 0 : index
    %1 = vector.load %arg2[%c0_1, %c0_2] : memref<16x256xf32, #tpu.memory_space<vmem>>, vector<16x256xf32>
    %2 = vector.extract_strided_slice %1 {offsets = [0, 0], sizes = [16, 128], strides = [1, 1]} : vector<16x256xf32> to vector<16x128xf32>
    %3 = vector.extract_strided_slice %1 {offsets = [0, 128], sizes = [16, 128], strides = [1, 1]} : vector<16x256xf32> to vector<16x128xf32>
    %4 = math.exp %3 : vector<16x128xf32>
    %5 = arith.mulf %0, %4 : vector<16x128xf32>
    %6 = arith.addf %5, %2 : vector<16x128xf32>
    %c0_3 = arith.constant 0 : index
    %c0_4 = arith.constant 0 : index
    %7 = vector.load %arg3[%c0_3, %c0_4] : memref<16x128xf32, #tpu.memory_space<vmem>>, vector<16x128xf32>
    tpu.vector_store %arg3[%c0_3, %c0_4], %6 {strides = array<i32>} : memref<16x128xf32, #tpu.memory_space<vmem>>, vector<16x128xf32>,
    %cst = arith.constant dense<0.000000e+00> : vector<16xf32>
    %8 = vector.multi_reduction <add>, %3, %cst [1] : vector<16x128xf32> to vector<16xf32>
    %9 = vector.shape_cast %8 : vector<16xf32> to vector<16x1xf32>
    %c0_5 = arith.constant 0 : index
    %c0_6 = arith.constant 0 : index
    %10 = vector.load %arg4[%c0_5, %c0_6] : memref<16x1xf32, #tpu.memory_space<vmem>>, vector<16x1xf32>
    tpu.vector_store %arg4[%c0_5, %c0_6], %9 {strides = array<i32>} : memref<16x1xf32, #tpu.memory_space<vmem>>, vector<16x1xf32>,
    return
  }
  func.func @transform_0(%arg0: i32) -> (i32, i32) {
    %c0_i32 = arith.constant 0 : i32
    %c0_i32_0 = arith.constant 0 : i32
    return %arg0, %c0_i32 : i32, i32
  }
  func.func @transform_1(%arg0: i32) -> (i32, i32) {
    %c0_i32 = arith.constant 0 : i32
    %c0_i32_0 = arith.constant 0 : i32
    return %arg0, %c0_i32 : i32, i32
  }
  func.func @transform_2(%arg0: i32) -> (i32, i32) {
    %c0_i32 = arith.constant 0 : i32
    %c0_i32_0 = arith.constant 0 : i32
    return %arg0, %c0_i32 : i32, i32
  }
  func.func @transform_3(%arg0: i32) -> (i32, i32) {
    %c0_i32 = arith.constant 0 : i32
    %c0_i32_0 = arith.constant 0 : i32
    return %arg0, %c0_i32 : i32, i32
  }
}

</mosaic_0001>

<llo_original>
// kernel: tpu_custom_call.1
$region0: #{tpu_custom_call.1}
  #allocation0 [shape = 'u32[]', space=smem, size = 0x4, offset = 0x4, fixed_abs, tag = 'smem constant byte address 0x4 - core index']
  #allocation1 [shape = 'u32[144,128]{1,0:T(1,128)}', space=vmem, size = 0x12000, scoped, tag = 'internal scratch']
  %s0 = inlined_call_operand.hbm [shape: f32[16,128], index: 0, kind: input, shape index: {}]
  %s1 = inlined_call_operand.hbm [shape: f32[16,256], index: 1, kind: input, shape index: {}]
  %s2 = inlined_call_operand.hbm [shape: f32[16,128], index: 2, kind: output, shape index: {0}]
  %s3 = inlined_call_operand.vmem [shape: f32[16,1], index: 3, kind: output, shape index: {1}]
  %4 = xla_tuple %s2, %s3
  %s5 = sld [smem:[#allocation0]]
  $region34: #{tpu_custom_call.1} parent=0
    _
  %s7 = ssub.s32 1, %s5
  %s8 = scalar_select 0, %s7, %s5
  $region1: #{tpu_custom_call.1} parent=0
    #allocation2 [shape = 'u8[8192]{0}', space=vmem, size = 0x2000, scoped, tag = 'input window, operand 0, single buffered']
    #allocation3 [shape = 's32[1]{0}', space=sflag, size = 0x4, scoped, tag = 'scoped memory for tpu_custom_call.1']
    #allocation4 [shape = 's32[1]{0}', space=sflag, size = 0x4, scoped, tag = 'scoped memory for tpu_custom_call.1']
    #allocation5 [shape = 'u8[16384]{0}', space=vmem, size = 0x4000, scoped, tag = 'input window, operand 1, single buffered']
    #allocation6 [shape = 's32[1]{0}', space=sflag, size = 0x4, scoped, tag = 'scoped memory for tpu_custom_call.1']
    #allocation7 [shape = 'u8[8192]{0}', space=vmem, size = 0x2000, scoped, tag = 'output window, operand 0, single buffered']
    %9 = vsyncpa [#allocation3], 0
    %10 = vsyncpa [#allocation6], 0
    %11 = vsyncpa [#allocation4], 0
    // Predicated region
    $region2: #{tpu_custom_call.1} parent=1 // pred_check
      _
    $region3: #{tpu_custom_call.1} parent=1 // pred_check_branch
      %13 = sbr.rel (0) target = $region5
    $region4: #{tpu_custom_call.1} parent=1 // pred_region
      %s15 = ssub.s32 256, 256
      %16 = vsyncadd [#allocation3], %s15
      %s17 = sshll.u32 [#allocation2], 4
      %s18 = int_to_ptr.vmem [resolvable:$true] %s17
      %23 = dma.hbm_to_vmem [thread:$0]  %s0, 256, %s18, [#allocation3], 128, 128, 8
    $region5: #{tpu_custom_call.1} parent=1 // pred_fallthru
      _
    // Predicated region
    $region6: #{tpu_custom_call.1} parent=1 // pred_check
      _
    $region7: #{tpu_custom_call.1} parent=1 // pred_check_branch
      %25 = sbr.rel (0) target = $region9
    $region8: #{tpu_custom_call.1} parent=1 // pred_region
      %s27 = ssub.s32 512, 512
      %28 = vsyncadd [#allocation6], %s27
      %s29 = sshll.u32 [#allocation5], 4
      %s30 = int_to_ptr.vmem [resolvable:$true] %s29
      %35 = dma.hbm_to_vmem [thread:$0]  %s1, 512, %s30, [#allocation6], 256, 256, 16
    $region9: #{tpu_custom_call.1} parent=1 // pred_fallthru
      _
    // Predicated region
    $region10: #{tpu_custom_call.1} parent=1 // pred_check
      _
    $region11: #{tpu_custom_call.1} parent=1 // pred_check_branch
      %37 = sbr.rel (0) target = $region13
    $region12: #{tpu_custom_call.1} parent=1 // pred_region
      %38 = dma.done [#allocation3], 256
    $region13: #{tpu_custom_call.1} parent=1 // pred_fallthru
      _
    // Predicated region
    $region14: #{tpu_custom_call.1} parent=1 // pred_check
      _
    $region15: #{tpu_custom_call.1} parent=1 // pred_check_branch
      %40 = sbr.rel (0) target = $region17
    $region16: #{tpu_custom_call.1} parent=1 // pred_region
      %41 = dma.done [#allocation6], 512
    $region17: #{tpu_custom_call.1} parent=1 // pred_fallthru
      _
    %v42 = vld [vmem:[#allocation2] sm:$0xff]
    %v43 = vld [vmem:[#allocation2 + $0x8] sm:$0xff]
    %v44 = vld [vmem:[#allocation5] sm:$0xff]
    %v45 = vld [vmem:[#allocation5 + $0x8] sm:$0xff]
    %v46 = vld [vmem:[#allocation5 + $0x10] sm:$0xff]
    %v47 = vld [vmem:[#allocation5 + $0x18] sm:$0xff]
    %v48 = vmul.f32 %v45, 1.442695
    %v49 = vpow.pop %v48
    %v50 = vmul.f32 %v47, 1.442695
    %v51 = vpow.pop %v50
    %v52 = vmul.f32 %v42, %v49
    %v53 = vmul.f32 %v43, %v51
    %v54 = vadd.f32 %v52, %v44
    %v55 = vadd.f32 %v53, %v46
    %56 = vst [vmem:[#allocation7] sm:$0xff] %v54
    %57 = vst [vmem:[#allocation7 + $0x8] sm:$0xff] %v55
    %58 = vadd.xlane.f32.xlu0 %v45
    %v59 = vpop.xlane.xlu0 %58
    %60 = vadd.xlane.f32.xlu0 %v47
    %v61 = vpop.xlane.xlu0 %60
    %vm62 = vcmask 7168
    %63 = vst.msk [vmem:[%s3] sm:$0xff] %vm62, %v59
    %64 = vst.msk [vmem:[%s3 + $0x8] sm:$0xff] %vm62, %v61
    // Predicated region
    $region18: #{tpu_custom_call.1} parent=1 // pred_check
      _
    $region19: #{tpu_custom_call.1} parent=1 // pred_check_branch
      %66 = sbr.rel (0) target = $region21
    $region20: #{tpu_custom_call.1} parent=1 // pred_region
      %s68 = ssub.s32 256, 256
      %69 = vsyncadd [#allocation4], %s68
      %s70 = sshll.u32 [#allocation7], 4
      %s71 = int_to_ptr.vmem [resolvable:$true] %s70
      %76 = dma.vmem_to_hbm [thread:$0]  %s71, 256, %s2, [#allocation4], 128, 128, 8
    $region21: #{tpu_custom_call.1} parent=1 // pred_fallthru
      _
    // Predicated region
    $region22: #{tpu_custom_call.1} parent=1 // pred_check
      _
    $region23: #{tpu_custom_call.1} parent=1 // pred_check_branch
      %78 = sbr.rel (0) target = $region25
    $region24: #{tpu_custom_call.1} parent=1 // pred_region
      _
    $region25: #{tpu_custom_call.1} parent=1 // pred_fallthru
      _
    // Predicated region
    $region26: #{tpu_custom_call.1} parent=1 // pred_check
      _
    $region27: #{tpu_custom_call.1} parent=1 // pred_check_branch
      %80 = sbr.rel (0) target = $region29
    $region28: #{tpu_custom_call.1} parent=1 // pred_region
      %81 = dma.done [#allocation4], 256
    $region29: #{tpu_custom_call.1} parent=1 // pred_fallthru
      _
    // Predicated region
    $region30: #{tpu_custom_call.1} parent=1 // pred_check
      _
    $region31: #{tpu_custom_call.1} parent=1 // pred_check_branch
      %83 = sbr.rel (0) target = $region33
    $region32: #{tpu_custom_call.1} parent=1 // pred_region
      _
    $region33: #{tpu_custom_call.1} parent=1 // pred_fallthru
      _
    %84 = vsyncpa [#allocation3], 1
    %85 = vsyncpa [#allocation6], 1
    %86 = vsyncpa [#allocation4], 1

</llo_original>
